<compile_context>
chip_gen: v7x
topology: tpu7x:2x2x1
jax: 0.10.0
libtpu: 0.0.40
codegen_flags: <defaults>
</compile_context>

<pallas_src>
import jax
import jax.numpy as jnp
from jax.experimental import pallas as pl
from jax.experimental.pallas import tpu as pltpu

NEG_SLOPE = 0.01  # nn.LeakyReLU default
BN_EPS = 1e-5


def _aff_kernel(x_ref, y_ref,
                w1l_ref, b1l_ref,
                w1g_ref, b1g_ref,
                w2l_ref, w2g_ref, b2f_ref,
                o_ref):
    x = x_ref[...]                                  # (C, Lt) f32
    y = y_ref[...]                                  # (C, Lt) f32
    xb = x.astype(jnp.bfloat16)
    yb = y.astype(jnp.bfloat16)

    # Layer 1 (1x1 conv + folded BN) per branch: bf16 MXU dot, f32 accumulate.
    hl = jnp.dot(w1l_ref[...], xb, preferred_element_type=jnp.float32) + b1l_ref[...]
    hl = jnp.where(hl > 0, hl, NEG_SLOPE * hl)      # LeakyReLU
    hg = jnp.dot(w1g_ref[...], yb, preferred_element_type=jnp.float32) + b1g_ref[...]
    hg = jnp.where(hg > 0, hg, NEG_SLOPE * hg)

    # Layer 2 per branch, biases pre-summed (only xl + xg is used downstream).
    s = (jnp.dot(w2l_ref[...], hl.astype(jnp.bfloat16),
                 preferred_element_type=jnp.float32)
         + jnp.dot(w2g_ref[...], hg.astype(jnp.bfloat16),
                   preferred_element_type=jnp.float32)
         + b2f_ref[...])                            # (C, Lt) f32

    wei = jax.nn.sigmoid(s)                         # EUP
    o_ref[...] = y + (x - y) * wei                  # == x*wei + y*(1-wei)


def _pick_l_tile(L):
    # Largest lane-dense tile (multiple of 128) dividing L; else the full dim.
    for t in (512, 256, 128):
        if L % t == 0:
            return t
    return L


def aff_forward(x, y, kparams):
    """x, y: (N, C, L) f32.  kparams: BN-folded kernel params (prepare_kernel_params)."""
    N, C, L = x.shape
    tile_L = _pick_l_tile(L)
    num_tiles = L // tile_L
    Ci = kparams["w1l"].shape[0]

    io_spec = pl.BlockSpec((None, C, tile_L), lambda n, j: (n, 0, j))
    w_spec = lambda shape: pl.BlockSpec(shape, lambda n, j: (0, 0))  # constant -> DMA once

    NL = N * L
    flops = 8 * Ci * C * NL + 6 * C * NL
    wbytes = 4 * Ci * C * 2 + (2 * Ci + C) * 4
    bytes_accessed = 3 * C * NL * 4 + wbytes

    return pl.pallas_call(
        _aff_kernel,
        out_shape=jax.ShapeDtypeStruct((N, C, L), jnp.float32),
        grid_spec=pltpu.PrefetchScalarGridSpec(
            num_scalar_prefetch=0,
            grid=(N, num_tiles),
            in_specs=[
                io_spec, io_spec,                      # x, y blocks (C, tile_L)
                w_spec((Ci, C)), w_spec((Ci, 1)),      # local  layer 1
                w_spec((Ci, C)), w_spec((Ci, 1)),      # global layer 1
                w_spec((C, Ci)), w_spec((C, Ci)),      # layer 2 weights
                w_spec((C, 1)),                        # layer 2 bias (summed)
            ],
            out_specs=io_spec,
        ),
        compiler_params=pltpu.CompilerParams(
            dimension_semantics=("parallel", "parallel")),
        cost_estimate=pl.CostEstimate(
            flops=flops, transcendentals=C * NL, bytes_accessed=bytes_accessed),
    )(x, y,
      kparams["w1l"], kparams["b1l"],
      kparams["w1g"], kparams["b1g"],
      kparams["w2l"], kparams["w2g"], kparams["b2f"])


def _fold_bn(w, b, gamma, beta, mean, var, eps=BN_EPS):
    """Fold eval-mode BatchNorm1d into the preceding 1x1 conv."""
    scale = gamma / jnp.sqrt(var + eps)              # (Cout,)
    w_f = w * scale[:, None]
    b_f = scale * (b - mean) + beta
    return w_f.astype(jnp.float32), b_f[:, None].astype(jnp.float32)


def make_params(key, channels, r):
    """Unfused, BN-folded f32 parameters (used directly by the pure-JAX reference)."""
    inter = channels // r
    ks = jax.random.split(key, 16)

    def conv_bn(k0, k1, k2, k3, cin, cout):
        w = 0.05 * jax.random.normal(k0, (cout, cin), jnp.float32)
        b = 0.05 * jax.random.normal(k1, (cout,), jnp.float32)
        gamma = 1.0 + 0.1 * jax.random.normal(k2, (cout,), jnp.float32)
        beta = 0.1 * jax.random.normal(k3, (cout,), jnp.float32)
        mean = jnp.zeros((cout,), jnp.float32)       # fresh BN running stats
        var = jnp.ones((cout,), jnp.float32)
        return _fold_bn(w, b, gamma, beta, mean, var)

    w1l, b1l = conv_bn(ks[0], ks[1], ks[2], ks[3], channels, inter)
    w2l, b2l = conv_bn(ks[4], ks[5], ks[6], ks[7], inter, channels)
    w1g, b1g = conv_bn(ks[8], ks[9], ks[10], ks[11], channels, inter)
    w2g, b2g = conv_bn(ks[12], ks[13], ks[14], ks[15], inter, channels)
    return dict(w1l=w1l, b1l=b1l, w2l=w2l, b2l=b2l,
                w1g=w1g, b1g=b1g, w2g=w2g, b2g=b2g)


def prepare_kernel_params(p):
    """Cast matmul weights to bf16 and pre-sum the second-layer biases."""
    return dict(
        w1l=p["w1l"].astype(jnp.bfloat16), b1l=p["b1l"],
        w1g=p["w1g"].astype(jnp.bfloat16), b1g=p["b1g"],
        w2l=p["w2l"].astype(jnp.bfloat16),
        w2g=p["w2g"].astype(jnp.bfloat16),
        b2f=p["b2l"] + p["b2g"],
    )


def aff_reference(x, y, p):
    """Pure-JAX f32 reference (matmul operands bf16-rounded to match the kernel)."""
    rnd = lambda a: a.astype(jnp.bfloat16).astype(jnp.float32)

    def branch(inp, w1, b1, w2, b2):
        h = jnp.einsum("oc,ncl->nol", rnd(w1), rnd(inp)) + b1[None]
        h = jnp.where(h > 0, h, NEG_SLOPE * h)
        return jnp.einsum("oc,ncl->nol", rnd(w2), h) + b2[None]

    xl = branch(x, p["w1l"], p["b1l"], p["w2l"], p["b2l"])
    xg = branch(y, p["w1g"], p["b1g"], p["w2g"], p["b2g"])
    wei = jax.nn.sigmoid(xl + xg)
    return x * wei + y * (1.0 - wei)


if __name__ == "__main__":
    # TODO(synk): BatchNorm1d is implemented in eval mode (running stats folded
    # into the 1x1 convs); PyTorch's default training-mode batch statistics are
    # not reproduced.
    N, C, L, R = 2, 128, 128, 4  # small AFF: channels=128, r=4 -> inter=32

    key = jax.random.PRNGKey(0)
    kx, ky, kp = jax.random.split(key, 3)
    x = jax.random.normal(kx, (N, C, L), jnp.float32)
    y = jax.random.normal(ky, (N, C, L), jnp.float32)
    params = make_params(kp, C, R)
    kparams = prepare_kernel_params(params)

    out = aff_forward(x, y, kparams)
    out = jax.block_until_ready(out)

    ref = aff_reference(x, y, params)
    assert out.shape == (N, C, L)
    assert jnp.allclose(out, ref, atol=1e-2, rtol=1e-2), "mismatch vs reference"

    print("KERNEL_OK")
</pallas_src>

<mosaic_0001>
module attributes {stable_mosaic.version = 11 : i64} {
  func.func @_aff_kernel(%arg0: i32, %arg1: i32, %arg2: memref<1x128x128xf32, #tpu.memory_space<vmem>>, %arg3: memref<1x128x128xf32, #tpu.memory_space<vmem>>, %arg4: memref<32x128xbf16, #tpu.memory_space<vmem>>, %arg5: memref<32x1xf32, #tpu.memory_space<vmem>>, %arg6: memref<32x128xbf16, #tpu.memory_space<vmem>>, %arg7: memref<32x1xf32, #tpu.memory_space<vmem>>, %arg8: memref<128x32xbf16, #tpu.memory_space<vmem>>, %arg9: memref<128x32xbf16, #tpu.memory_space<vmem>>, %arg10: memref<128x1xf32, #tpu.memory_space<vmem>>, %arg11: memref<1x128x128xf32, #tpu.memory_space<vmem>>) attributes {dimension_semantics = [#tpu.dimension_semantics<parallel>, #tpu.dimension_semantics<parallel>], iteration_bounds = array<i64: 2, 1>, scalar_prefetch = 0 : i64, scratch_operands = 0 : i64, tpu.core_type = #tpu.core_type<tc>, window_params = [{transform_indices = @transform_0, window_bounds = array<i64: 1, 128, 128>}, {transform_indices = @transform_1, window_bounds = array<i64: 1, 128, 128>}, {pipeline_mode = #tpu.pipeline_mode<synchronous>, transform_indices = @transform_2, window_bounds = array<i64: 32, 128>}, {pipeline_mode = #tpu.pipeline_mode<synchronous>, transform_indices = @transform_3, window_bounds = array<i64: 32, 1>}, {pipeline_mode = #tpu.pipeline_mode<synchronous>, transform_indices = @transform_4, window_bounds = array<i64: 32, 128>}, {pipeline_mode = #tpu.pipeline_mode<synchronous>, transform_indices = @transform_5, window_bounds = array<i64: 32, 1>}, {pipeline_mode = #tpu.pipeline_mode<synchronous>, transform_indices = @transform_6, window_bounds = array<i64: 128, 32>}, {pipeline_mode = #tpu.pipeline_mode<synchronous>, transform_indices = @transform_7, window_bounds = array<i64: 128, 32>}, {pipeline_mode = #tpu.pipeline_mode<synchronous>, transform_indices = @transform_8, window_bounds = array<i64: 128, 1>}, {transform_indices = @transform_9, window_bounds = array<i64: 1, 128, 128>}]} {
    %c0 = arith.constant 0 : index
    %c0_0 = arith.constant 0 : index
    %c0_1 = arith.constant 0 : index
    %0 = vector.load %arg2[%c0, %c0_0, %c0_1] : memref<1x128x128xf32, #tpu.memory_space<vmem>>, vector<1x128x128xf32>
    %1 = vector.shape_cast %0 : vector<1x128x128xf32> to vector<128x128xf32>
    %c0_2 = arith.constant 0 : index
    %c0_3 = arith.constant 0 : index
    %c0_4 = arith.constant 0 : index
    %2 = vector.load %arg3[%c0_2, %c0_3, %c0_4] : memref<1x128x128xf32, #tpu.memory_space<vmem>>, vector<1x128x128xf32>
    %3 = vector.shape_cast %2 : vector<1x128x128xf32> to vector<128x128xf32>
    %4 = arith.truncf %1 : vector<128x128xf32> to vector<128x128xbf16>
    %5 = arith.truncf %3 : vector<128x128xf32> to vector<128x128xbf16>
    %c0_5 = arith.constant 0 : index
    %c0_6 = arith.constant 0 : index
    %6 = vector.load %arg4[%c0_5, %c0_6] : memref<32x128xbf16, #tpu.memory_space<vmem>>, vector<32x128xbf16>
    %cst = arith.constant dense<0.000000e+00> : vector<32x128xf32>
    %7 = tpu.matmul %6, %4, %cst {dimension_numbers = #tpu.dot_dimension_numbers<[1], [0], [0], [1], [0, 0, 1, 1], [], []>} : vector<32x128xbf16>, vector<128x128xbf16>, vector<32x128xf32> -> vector<32x128xf32>
    %c0_7 = arith.constant 0 : index
    %c0_8 = arith.constant 0 : index
    %8 = vector.load %arg5[%c0_7, %c0_8] : memref<32x1xf32, #tpu.memory_space<vmem>>, vector<32x1xf32>
    %9 = vector.broadcast %8 : vector<32x1xf32> to vector<32x128xf32>
    %10 = arith.addf %7, %9 : vector<32x128xf32>
    %cst_9 = arith.constant 0.000000e+00 : f32
    %11 = vector.broadcast %cst_9 : f32 to vector<32x128xf32>
    %12 = arith.cmpf ogt, %10, %11 : vector<32x128xf32>
    %cst_10 = arith.constant 0.00999999977 : f32
    %13 = vector.broadcast %cst_10 : f32 to vector<32x128xf32>
    %14 = arith.mulf %13, %10 : vector<32x128xf32>
    %15 = arith.select %12, %10, %14 : vector<32x128xi1>, vector<32x128xf32>
    %c0_11 = arith.constant 0 : index
    %c0_12 = arith.constant 0 : index
    %16 = vector.load %arg6[%c0_11, %c0_12] : memref<32x128xbf16, #tpu.memory_space<vmem>>, vector<32x128xbf16>
    %cst_13 = arith.constant dense<0.000000e+00> : vector<32x128xf32>
    %17 = tpu.matmul %16, %5, %cst_13 {dimension_numbers = #tpu.dot_dimension_numbers<[1], [0], [0], [1], [0, 0, 1, 1], [], []>} : vector<32x128xbf16>, vector<128x128xbf16>, vector<32x128xf32> -> vector<32x128xf32>
    %c0_14 = arith.constant 0 : index
    %c0_15 = arith.constant 0 : index
    %18 = vector.load %arg7[%c0_14, %c0_15] : memref<32x1xf32, #tpu.memory_space<vmem>>, vector<32x1xf32>
    %19 = vector.broadcast %18 : vector<32x1xf32> to vector<32x128xf32>
    %20 = arith.addf %17, %19 : vector<32x128xf32>
    %cst_16 = arith.constant 0.000000e+00 : f32
    %21 = vector.broadcast %cst_16 : f32 to vector<32x128xf32>
    %22 = arith.cmpf ogt, %20, %21 : vector<32x128xf32>
    %cst_17 = arith.constant 0.00999999977 : f32
    %23 = vector.broadcast %cst_17 : f32 to vector<32x128xf32>
    %24 = arith.mulf %23, %20 : vector<32x128xf32>
    %25 = arith.select %22, %20, %24 : vector<32x128xi1>, vector<32x128xf32>
    %c0_18 = arith.constant 0 : index
    %c0_19 = arith.constant 0 : index
    %26 = vector.load %arg8[%c0_18, %c0_19] : memref<128x32xbf16, #tpu.memory_space<vmem>>, vector<128x32xbf16>
    %27 = arith.truncf %15 : vector<32x128xf32> to vector<32x128xbf16>
    %cst_20 = arith.constant dense<0.000000e+00> : vector<128x128xf32>
    %28 = tpu.matmul %26, %27, %cst_20 {dimension_numbers = #tpu.dot_dimension_numbers<[1], [0], [0], [1], [0, 0, 1, 1], [], []>} : vector<128x32xbf16>, vector<32x128xbf16>, vector<128x128xf32> -> vector<128x128xf32>
    %c0_21 = arith.constant 0 : index
    %c0_22 = arith.constant 0 : index
    %29 = vector.load %arg9[%c0_21, %c0_22] : memref<128x32xbf16, #tpu.memory_space<vmem>>, vector<128x32xbf16>
    %30 = arith.truncf %25 : vector<32x128xf32> to vector<32x128xbf16>
    %cst_23 = arith.constant dense<0.000000e+00> : vector<128x128xf32>
    %31 = tpu.matmul %29, %30, %cst_23 {dimension_numbers = #tpu.dot_dimension_numbers<[1], [0], [0], [1], [0, 0, 1, 1], [], []>} : vector<128x32xbf16>, vector<32x128xbf16>, vector<128x128xf32> -> vector<128x128xf32>
    %32 = arith.addf %28, %31 : vector<128x128xf32>
    %c0_24 = arith.constant 0 : index
    %c0_25 = arith.constant 0 : index
    %33 = vector.load %arg10[%c0_24, %c0_25] : memref<128x1xf32, #tpu.memory_space<vmem>>, vector<128x1xf32>
    %34 = vector.broadcast %33 : vector<128x1xf32> to vector<128x128xf32>
    %35 = arith.addf %32, %34 : vector<128x128xf32>
    %36 = arith.negf %35 : vector<128x128xf32>
    %37 = math.exp %36 : vector<128x128xf32>
    %cst_26 = arith.constant 1.000000e+00 : f32
    %38 = vector.broadcast %cst_26 : f32 to vector<128x128xf32>
    %39 = arith.addf %38, %37 : vector<128x128xf32>
    %40 = arith.divf %38, %39 : vector<128x128xf32>
    %41 = arith.subf %1, %3 : vector<128x128xf32>
    %42 = arith.mulf %41, %40 : vector<128x128xf32>
    %43 = arith.addf %3, %42 : vector<128x128xf32>
    %c0_27 = arith.constant 0 : index
    %c0_28 = arith.constant 0 : index
    %c0_29 = arith.constant 0 : index
    %44 = vector.load %arg11[%c0_27, %c0_28, %c0_29] : memref<1x128x128xf32, #tpu.memory_space<vmem>>, vector<1x128x128xf32>
    %45 = vector.shape_cast %44 : vector<1x128x128xf32> to vector<128x128xf32>
    %46 = vector.shape_cast %43 : vector<128x128xf32> to vector<1x128x128xf32>
    tpu.vector_store %arg11[%c0_27, %c0_28, %c0_29], %46 {strides = array<i32>} : memref<1x128x128xf32, #tpu.memory_space<vmem>>, vector<1x128x128xf32>,
    return
  }
  func.func @transform_0(%arg0: i32, %arg1: i32) -> (i32, i32, i32) {
    %c0_i32 = arith.constant 0 : i32
    %c0_i32_0 = arith.constant 0 : i32
    return %arg0, %c0_i32, %arg1 : i32, i32, i32
  }
  func.func @transform_1(%arg0: i32, %arg1: i32) -> (i32, i32, i32) {
    %c0_i32 = arith.constant 0 : i32
    %c0_i32_0 = arith.constant 0 : i32
    return %arg0, %c0_i32, %arg1 : i32, i32, i32
  }
  func.func @transform_2(%arg0: i32, %arg1: i32) -> (i32, i32) {
    %c0_i32 = arith.constant 0 : i32
    %c0_i32_0 = arith.constant 0 : i32
    %c0_i32_1 = arith.constant 0 : i32
    return %c0_i32, %c0_i32_0 : i32, i32
  }
  func.func @transform_3(%arg0: i32, %arg1: i32) -> (i32, i32) {
    %c0_i32 = arith.constant 0 : i32
    %c0_i32_0 = arith.constant 0 : i32
    %c0_i32_1 = arith.constant 0 : i32
    return %c0_i32, %c0_i32_0 : i32, i32
  }
  func.func @transform_4(%arg0: i32, %arg1: i32) -> (i32, i32) {
    %c0_i32 = arith.constant 0 : i32
    %c0_i32_0 = arith.constant 0 : i32
    %c0_i32_1 = arith.constant 0 : i32
    return %c0_i32, %c0_i32_0 : i32, i32
  }
  func.func @transform_5(%arg0: i32, %arg1: i32) -> (i32, i32) {
    %c0_i32 = arith.constant 0 : i32
    %c0_i32_0 = arith.constant 0 : i32
    %c0_i32_1 = arith.constant 0 : i32
    return %c0_i32, %c0_i32_0 : i32, i32
  }
  func.func @transform_6(%arg0: i32, %arg1: i32) -> (i32, i32) {
    %c0_i32 = arith.constant 0 : i32
    %c0_i32_0 = arith.constant 0 : i32
    %c0_i32_1 = arith.constant 0 : i32
    return %c0_i32, %c0_i32_0 : i32, i32
  }
  func.func @transform_7(%arg0: i32, %arg1: i32) -> (i32, i32) {
    %c0_i32 = arith.constant 0 : i32
    %c0_i32_0 = arith.constant 0 : i32
    %c0_i32_1 = arith.constant 0 : i32
    return %c0_i32, %c0_i32_0 : i32, i32
  }
  func.func @transform_8(%arg0: i32, %arg1: i32) -> (i32, i32) {
    %c0_i32 = arith.constant 0 : i32
    %c0_i32_0 = arith.constant 0 : i32
    %c0_i32_1 = arith.constant 0 : i32
    return %c0_i32, %c0_i32_0 : i32, i32
  }
  func.func @transform_9(%arg0: i32, %arg1: i32) -> (i32, i32, i32) {
    %c0_i32 = arith.constant 0 : i32
    %c0_i32_0 = arith.constant 0 : i32
    return %arg0, %c0_i32, %arg1 : i32, i32, i32
  }
}

</mosaic_0001>

<llo_original>
// kernel: tpu_custom_call.1
$region0: #{tpu_custom_call.1}
  #allocation0 [shape = 'u32[]', space=smem, size = 0x4, offset = 0x4, fixed_abs, tag = 'smem constant byte address 0x4 - core index']
  #allocation1 [shape = 'u32[144,128]{1,0:T(1,128)}', space=vmem, size = 0x12000, scoped, tag = 'internal scratch']
  %s0 = inlined_call_operand.vmem [shape: f32[2,128,128], index: 0, kind: input, shape index: {}]
  %s1 = inlined_call_operand.hbm [shape: f32[2,128,128], index: 1, kind: input, shape index: {}]
  %s2 = inlined_call_operand.vmem [shape: bf16[32,128], index: 2, kind: input, shape index: {}]
  %s3 = inlined_call_operand.vmem [shape: f32[32,1], index: 3, kind: input, shape index: {}]
  %s4 = inlined_call_operand.vmem [shape: bf16[32,128], index: 4, kind: input, shape index: {}]
  %s5 = inlined_call_operand.vmem [shape: f32[32,1], index: 5, kind: input, shape index: {}]
  %s6 = inlined_call_operand.vmem [shape: bf16[128,32], index: 6, kind: input, shape index: {}]
  %s7 = inlined_call_operand.vmem [shape: bf16[128,32], index: 7, kind: input, shape index: {}]
  %s8 = inlined_call_operand.vmem [shape: f32[128,1], index: 8, kind: input, shape index: {}]
  %s9 = inlined_call_operand.hbm [shape: f32[2,128,128], index: 9, kind: output, shape index: {}]
  %s10 = sld [smem:[#allocation0]]
  $region73: #{tpu_custom_call.1} parent=0
    _
  %s12 = ssub.s32 1, %s10
  %s13 = scalar_select 0, %s12, %s10
  $region1: #{tpu_custom_call.1} parent=0
    #allocation2 [shape = 'u8[131072]{0}', space=vmem, size = 0x20000, scoped, tag = 'input window, operand 1']
    #allocation3 [shape = 's32[2]{0}', space=sflag, size = 0x8, scoped, tag = 'scoped memory for tpu_custom_call.1']
    #allocation4 [shape = 's32[2]{0}', space=sflag, size = 0x8, scoped, tag = 'scoped memory for tpu_custom_call.1']
    #allocation5 [shape = 'u8[131072]{0}', space=vmem, size = 0x20000, scoped, tag = 'output window, operand 0']
    %14 = vsyncpa [#allocation3], 0
    %s15 = scalar_lea.sflag [#allocation3], 1
    %16 = vsyncpa %s15, 0
    %17 = vsyncpa [#allocation4], 0
    %s18 = scalar_lea.sflag [#allocation4], 1
    %19 = vsyncpa %s18, 0
    loop: start=0, step=1, limit=4
    $region2: #{tpu_custom_call.1} parent=1 // loop_pre_header
      _
    $region3: #{tpu_custom_call.1} parent=1 // loop_header
      %s21 = sphi 0, %s25
      %p22 = scmp.ge.s32.totalorder %s21, 4
      %s28 = sphi 0, %s40
      %s29 = sphi 0, %s36
      %s30 = sphi 0, %s28
      %s31 = sphi 0, %s29
      %s32 = sphi 0, %s30
      %s33 = sphi 0, %s31
      %s45 = sphi 0, %s47
      %s48 = sphi 0, %s45
      %s49 = sphi 0, %s48
      %s65 = sphi 0, %s49
      %s73 = sphi 0, %s75
      %s76 = sphi 0, %s73
      %s77 = sphi 0, %s76
      %s93 = sphi 0, %s77
      %s97 = sphi 0, %s97
      %s99 = sphi 0, %s97
      %s100 = sphi 0, %s99
      %s114 = sphi 0, %s100
      %s118 = sphi 0, %s118
      %s120 = sphi 0, %s118
      %s121 = sphi 0, %s120
      %s135 = sphi 0, %s121
      %s139 = sphi 0, %s139
      %s141 = sphi 0, %s139
      %s142 = sphi 0, %s141
      %s156 = sphi 0, %s142
      %s160 = sphi 0, %s160
      %s162 = sphi 0, %s160
      %s163 = sphi 0, %s162
      %s177 = sphi 0, %s163
      %s181 = sphi 0, %s181
      %s183 = sphi 0, %s181
      %s184 = sphi 0, %s183
      %s198 = sphi 0, %s184
      %s202 = sphi 0, %s202
      %s204 = sphi 0, %s202
      %s205 = sphi 0, %s204
      %s219 = sphi 0, %s205
      %s223 = sphi 0, %s223
      %s225 = sphi 0, %s223
      %s226 = sphi 0, %s225
      %s240 = sphi 0, %s226
      %s248 = sphi 0, %s250
      %s251 = sphi 0, %s248
      %s252 = sphi 0, %s251
      %s268 = sphi 0, %s252
    $region4: #{tpu_custom_call.1} parent=1 // loop_header_branch
      %24 = sbr.rel (%p22) target = $region8
    $region5: #{tpu_custom_call.1} parent=1 // loop_body
      %s26 = ssub.s32 %s21, 1
      %s27 = ssub.s32 %s21, 2
      %s34 = sadd.s32 1, %s29
      %p35 = scmp.ge.s32.totalorder %s34, 1
      %s36 = scalar_select %p35, 0, %s34
      %s37 = sadd.s32 1, %s28
      %s38 = scalar_select %p35, %s37, %s28
      %p39 = scmp.ge.s32.totalorder %s38, 2
      %s40 = scalar_select %p39, 0, %s38
      %s41 = ssub.s32 %s28, %s40
      %s42 = ssub.s32 %s29, %s36
      %s43 = sor.u32 %s41, %s42
      %p44 = scmp.eq.s32.totalorder %s43, 0
      %s46 = sadd.s32 %s45, 1
      %s47 = scalar_select %p44, %s45, %s46
      %p50 = pneg %p44
      %p51 = scmp.eq.s32.totalorder %s21, 1
      %p52 = por %p50, %p51
      %p53 = scmp.ne.s32.totalorder %s45, %s48
      %p54 = scmp.eq.s32.totalorder %s21, 0
      %p55 = por %p53, %p54
      %p56 = scmp.ne.s32.totalorder %s45, %s48
      %p57 = scmp.eq.s32.totalorder %s26, 1
      %p58 = por %p56, %p57
      %p59 = scmp.ne.s32.totalorder %s48, %s49
      %p60 = scmp.eq.s32.totalorder %s26, 0
      %p61 = por %p59, %p60
      %p62 = scmp.ne.s32.totalorder %s48, %s49
      %p63 = scmp.eq.s32.totalorder %s27, 1
      %p64 = por %p62, %p63
      %p66 = scmp.ne.s32.totalorder %s49, %s65
      %p67 = scmp.eq.s32.totalorder %s27, 0
      %p68 = por %p66, %p67
      %s69 = ssub.s32 %s28, %s40
      %s70 = ssub.s32 %s29, %s36
      %s71 = sor.u32 %s69, %s70
      %p72 = scmp.eq.s32.totalorder %s71, 0
      %s74 = sadd.s32 %s73, 1
      %s75 = scalar_select %p72, %s73, %s74
      %p78 = pneg %p72
      %p79 = scmp.eq.s32.totalorder %s21, 1
      %p80 = por %p78, %p79
      %p81 = scmp.ne.s32.totalorder %s73, %s76
      %p82 = scmp.eq.s32.totalorder %s21, 0
      %p83 = por %p81, %p82
      %p84 = scmp.ne.s32.totalorder %s73, %s76
      %p85 = scmp.eq.s32.totalorder %s26, 1
      %p86 = por %p84, %p85
      %p87 = scmp.ne.s32.totalorder %s76, %s77
      %p88 = scmp.eq.s32.totalorder %s26, 0
      %p89 = por %p87, %p88
      %p90 = scmp.ne.s32.totalorder %s76, %s77
      %p91 = scmp.eq.s32.totalorder %s27, 1
      %p92 = por %p90, %p91
      %p94 = scmp.ne.s32.totalorder %s77, %s93
      %p95 = scmp.eq.s32.totalorder %s27, 0
      %p96 = por %p94, %p95
      %s98 = sadd.s32 %s97, 1
      %p101 = scmp.eq.s32.totalorder %s21, 1
      %p102 = scmp.ne.s32.totalorder %s97, %s99
      %p103 = scmp.eq.s32.totalorder %s21, 0
      %p104 = por %p102, %p103
      %p105 = scmp.ne.s32.totalorder %s97, %s99
      %p106 = scmp.eq.s32.totalorder %s26, 1
      %p107 = por %p105, %p106
      %p108 = scmp.ne.s32.totalorder %s99, %s100
      %p109 = scmp.eq.s32.totalorder %s26, 0
      %p110 = por %p108, %p109
      %p111 = scmp.ne.s32.totalorder %s99, %s100
      %p112 = scmp.eq.s32.totalorder %s27, 1
      %p113 = por %p111, %p112
      %p115 = scmp.ne.s32.totalorder %s100, %s114
      %p116 = scmp.eq.s32.totalorder %s27, 0
      %p117 = por %p115, %p116
      %s119 = sadd.s32 %s118, 1
      %p122 = scmp.eq.s32.totalorder %s21, 1
      %p123 = scmp.ne.s32.totalorder %s118, %s120
      %p124 = scmp.eq.s32.totalorder %s21, 0
      %p125 = por %p123, %p124
      %p126 = scmp.ne.s32.totalorder %s118, %s120
      %p127 = scmp.eq.s32.totalorder %s26, 1
      %p128 = por %p126, %p127
      %p129 = scmp.ne.s32.totalorder %s120, %s121
      %p130 = scmp.eq.s32.totalorder %s26, 0
      %p131 = por %p129, %p130
      %p132 = scmp.ne.s32.totalorder %s120, %s121
      %p133 = scmp.eq.s32.totalorder %s27, 1
      %p134 = por %p132, %p133
      %p136 = scmp.ne.s32.totalorder %s121, %s135
      %p137 = scmp.eq.s32.totalorder %s27, 0
      %p138 = por %p136, %p137
      %s140 = sadd.s32 %s139, 1
      %p143 = scmp.eq.s32.totalorder %s21, 1
      %p144 = scmp.ne.s32.totalorder %s139, %s141
      %p145 = scmp.eq.s32.totalorder %s21, 0
      %p146 = por %p144, %p145
      %p147 = scmp.ne.s32.totalorder %s139, %s141
      %p148 = scmp.eq.s32.totalorder %s26, 1
      %p149 = por %p147, %p148
      %p150 = scmp.ne.s32.totalorder %s141, %s142
      %p151 = scmp.eq.s32.totalorder %s26, 0
      %p152 = por %p150, %p151
      %p153 = scmp.ne.s32.totalorder %s141, %s142
      %p154 = scmp.eq.s32.totalorder %s27, 1
      %p155 = por %p153, %p154
      %p157 = scmp.ne.s32.totalorder %s142, %s156
      %p158 = scmp.eq.s32.totalorder %s27, 0
      %p159 = por %p157, %p158
      %s161 = sadd.s32 %s160, 1
      %p164 = scmp.eq.s32.totalorder %s21, 1
      %p165 = scmp.ne.s32.totalorder %s160, %s162
      %p166 = scmp.eq.s32.totalorder %s21, 0
      %p167 = por %p165, %p166
      %p168 = scmp.ne.s32.totalorder %s160, %s162
      %p169 = scmp.eq.s32.totalorder %s26, 1
      %p170 = por %p168, %p169
      %p171 = scmp.ne.s32.totalorder %s162, %s163
      %p172 = scmp.eq.s32.totalorder %s26, 0
      %p173 = por %p171, %p172
      %p174 = scmp.ne.s32.totalorder %s162, %s163
      %p175 = scmp.eq.s32.totalorder %s27, 1
      %p176 = por %p174, %p175
      %p178 = scmp.ne.s32.totalorder %s163, %s177
      %p179 = scmp.eq.s32.totalorder %s27, 0
      %p180 = por %p178, %p179
      %s182 = sadd.s32 %s181, 1
      %p185 = scmp.eq.s32.totalorder %s21, 1
      %p186 = scmp.ne.s32.totalorder %s181, %s183
      %p187 = scmp.eq.s32.totalorder %s21, 0
      %p188 = por %p186, %p187
      %p189 = scmp.ne.s32.totalorder %s181, %s183
      %p190 = scmp.eq.s32.totalorder %s26, 1
      %p191 = por %p189, %p190
      %p192 = scmp.ne.s32.totalorder %s183, %s184
      %p193 = scmp.eq.s32.totalorder %s26, 0
      %p194 = por %p192, %p193
      %p195 = scmp.ne.s32.totalorder %s183, %s184
      %p196 = scmp.eq.s32.totalorder %s27, 1
      %p197 = por %p195, %p196
      %p199 = scmp.ne.s32.totalorder %s184, %s198
      %p200 = scmp.eq.s32.totalorder %s27, 0
      %p201 = por %p199, %p200
      %s203 = sadd.s32 %s202, 1
      %p206 = scmp.eq.s32.totalorder %s21, 1
      %p207 = scmp.ne.s32.totalorder %s202, %s204
      %p208 = scmp.eq.s32.totalorder %s21, 0
      %p209 = por %p207, %p208
      %p210 = scmp.ne.s32.totalorder %s202, %s204
      %p211 = scmp.eq.s32.totalorder %s26, 1
      %p212 = por %p210, %p211
      %p213 = scmp.ne.s32.totalorder %s204, %s205
      %p214 = scmp.eq.s32.totalorder %s26, 0
      %p215 = por %p213, %p214
      %p216 = scmp.ne.s32.totalorder %s204, %s205
      %p217 = scmp.eq.s32.totalorder %s27, 1
      %p218 = por %p216, %p217
      %p220 = scmp.ne.s32.totalorder %s205, %s219
      %p221 = scmp.eq.s32.totalorder %s27, 0
      %p222 = por %p220, %p221
      %s224 = sadd.s32 %s223, 1
      %p227 = scmp.eq.s32.totalorder %s21, 1
      %p228 = scmp.ne.s32.totalorder %s223, %s225
      %p229 = scmp.eq.s32.totalorder %s21, 0
      %p230 = por %p228, %p229
      %p231 = scmp.ne.s32.totalorder %s223, %s225
      %p232 = scmp.eq.s32.totalorder %s26, 1
      %p233 = por %p231, %p232
      %p234 = scmp.ne.s32.totalorder %s225, %s226
      %p235 = scmp.eq.s32.totalorder %s26, 0
      %p236 = por %p234, %p235
      %p237 = scmp.ne.s32.totalorder %s225, %s226
      %p238 = scmp.eq.s32.totalorder %s27, 1
      %p239 = por %p237, %p238
      %p241 = scmp.ne.s32.totalorder %s226, %s240
      %p242 = scmp.eq.s32.totalorder %s27, 0
      %p243 = por %p241, %p242
      %s244 = ssub.s32 %s28, %s40
      %s245 = ssub.s32 %s29, %s36
      %s246 = sor.u32 %s244, %s245
      %p247 = scmp.eq.s32.totalorder %s246, 0
      %s249 = sadd.s32 %s248, 1
      %s250 = scalar_select %p247, %s248, %s249
      %p253 = pneg %p247
      %p254 = scmp.eq.s32.totalorder %s21, 1
      %p255 = por %p253, %p254
      %p256 = scmp.ne.s32.totalorder %s248, %s251
      %p257 = scmp.eq.s32.totalorder %s21, 0
      %p258 = por %p256, %p257
      %p259 = scmp.ne.s32.totalorder %s248, %s251
      %p260 = scmp.eq.s32.totalorder %s26, 1
      %p261 = por %p259, %p260
      %p262 = scmp.ne.s32.totalorder %s251, %s252
      %p263 = scmp.eq.s32.totalorder %s26, 0
      %p264 = por %p262, %p263
      %p265 = scmp.ne.s32.totalorder %s251, %s252
      %p266 = scmp.eq.s32.totalorder %s27, 1
      %p267 = por %p265, %p266
      %p269 = scmp.ne.s32.totalorder %s252, %s268
      %p270 = scmp.eq.s32.totalorder %s27, 0
      %p271 = por %p269, %p270
      %p272 = scmp.le.s32.totalorder 1, %s21
      %p273 = scmp.lt.s32.totalorder %s21, 3
      %p274 = pnand %p272, %p273
      %p275 = pneg %p274
      // Predicated region
      $region9: #{tpu_custom_call.1} parent=5 // pred_check
        _
      $region10: #{tpu_custom_call.1} parent=5 // pred_check_branch
        %277 = sbr.rel (%p274) target = $region12
      $region11: #{tpu_custom_call.1} parent=5 // pred_region
        %s278 = ssub.s32 %s21, 1
        // Predicated region
        $region13: #{tpu_custom_call.1} parent=11 // pred_check
          %p279 = pneg %p110
        $region14: #{tpu_custom_call.1} parent=11 // pred_check_branch
          %281 = sbr.rel (%p279) target = $region16
        $region15: #{tpu_custom_call.1} parent=11 // pred_region
          _
        $region16: #{tpu_custom_call.1} parent=11 // pred_fallthru
          _
        // Predicated region
        $region17: #{tpu_custom_call.1} parent=11 // pred_check
          %p282 = pneg %p131
        $region18: #{tpu_custom_call.1} parent=11 // pred_check_branch
          %284 = sbr.rel (%p282) target = $region20
        $region19: #{tpu_custom_call.1} parent=11 // pred_region
          _
        $region20: #{tpu_custom_call.1} parent=11 // pred_fallthru
          _
        // Predicated region
        $region21: #{tpu_custom_call.1} parent=11 // pred_check
          %p285 = pneg %p152
        $region22: #{tpu_custom_call.1} parent=11 // pred_check_branch
          %287 = sbr.rel (%p285) target = $region24
        $region23: #{tpu_custom_call.1} parent=11 // pred_region
          _
        $region24: #{tpu_custom_call.1} parent=11 // pred_fallthru
          _
        // Predicated region
        $region25: #{tpu_custom_call.1} parent=11 // pred_check
          %p288 = pneg %p173
        $region26: #{tpu_custom_call.1} parent=11 // pred_check_branch
          %290 = sbr.rel (%p288) target = $region28
        $region27: #{tpu_custom_call.1} parent=11 // pred_region
          _
        $region28: #{tpu_custom_call.1} parent=11 // pred_fallthru
          _
        // Predicated region
        $region29: #{tpu_custom_call.1} parent=11 // pred_check
          %p291 = pneg %p194
        $region30: #{tpu_custom_call.1} parent=11 // pred_check_branch
          %293 = sbr.rel (%p291) target = $region32
        $region31: #{tpu_custom_call.1} parent=11 // pred_region
          _
        $region32: #{tpu_custom_call.1} parent=11 // pred_fallthru
          _
        // Predicated region
        $region33: #{tpu_custom_call.1} parent=11 // pred_check
          %p294 = pneg %p215
        $region34: #{tpu_custom_call.1} parent=11 // pred_check_branch
          %296 = sbr.rel (%p294) target = $region36
        $region35: #{tpu_custom_call.1} parent=11 // pred_region
          _
        $region36: #{tpu_custom_call.1} parent=11 // pred_fallthru
          _
        // Predicated region
        $region37: #{tpu_custom_call.1} parent=11 // pred_check
          %p297 = pneg %p236
        $region38: #{tpu_custom_call.1} parent=11 // pred_check_branch
          %299 = sbr.rel (%p297) target = $region40
        $region39: #{tpu_custom_call.1} parent=11 // pred_region
          _
        $region40: #{tpu_custom_call.1} parent=11 // pred_fallthru
          _
      $region12: #{tpu_custom_call.1} parent=5 // pred_fallthru
        _
      %p300 = scmp.lt.s32.totalorder %s21, 2
      // Predicated region
      $region41: #{tpu_custom_call.1} parent=5 // pred_check
        %p301 = pneg %p300
      $region42: #{tpu_custom_call.1} parent=5 // pred_check_branch
        %303 = sbr.rel (%p301) target = $region44
      $region43: #{tpu_custom_call.1} parent=5 // pred_region
        // Predicated region
        $region45: #{tpu_custom_call.1} parent=43 // pred_check
          %p304 = pneg %p55
        $region46: #{tpu_custom_call.1} parent=43 // pred_check_branch
          %306 = sbr.rel (%p304) target = $region48
        $region47: #{tpu_custom_call.1} parent=43 // pred_region
          %p307 = scmp.lt.s32.totalorder %s28, 1
          %s308 = scalar_select %p307, %s28, 1
          %p309 = scmp.lt.s32.totalorder %s29, 0
          %s310 = scalar_select %p309, %s29, 0
          %s311 = smul.addr %s308, 16
          %s312 = sadd.s32 %s310, %s311
          %s313 = smul.addr %s312, 8
          %s314 = scalar_lea.vmem %s0, %s313
        $region48: #{tpu_custom_call.1} parent=43 // pred_fallthru
          _
        // Predicated region
        $region49: #{tpu_custom_call.1} parent=43 // pred_check
          %p315 = pneg %p83
        $region50: #{tpu_custom_call.1} parent=43 // pred_check_branch
          %317 = sbr.rel (%p315) target = $region52
        $region51: #{tpu_custom_call.1} parent=43 // pred_region
          %s318 = sand.u32 %s73, 1
          %s319 = scalar_lea.sflag [#allocation3], %s318
          %s320 = sand.u32 %s73, 1
          %s321 = smul.addr %s320, 128
          %s322 = scalar_lea.vmem [#allocation2], %s321
          %s324 = ssub.s32 2048, 2048
          %325 = vsyncadd %s319, %s324
          %s326 = smul.addr %s28, 16
          %s327 = sadd.s32 %s29, %s326
          %s328 = smul.addr %s327, 128
          %s329 = scalar_lea.hbm %s1, %s328
          %s330 = sshll.u32 %s322, 4
          %s331 = int_to_ptr.vmem [resolvable:$true] %s330
          %336 = dma.hbm_to_vmem [thread:$0]  %s329, 2048, %s331, %s319, 128, 128, 8
        $region52: #{tpu_custom_call.1} parent=43 // pred_fallthru
          _
      $region44: #{tpu_custom_call.1} parent=5 // pred_fallthru
        _
      %p337 = scmp.le.s32.totalorder 1, %s21
      %p338 = scmp.lt.s32.totalorder %s21, 3
      %p339 = pnand %p337, %p338
      %p340 = pneg %p339
      // Predicated region
      $region53: #{tpu_custom_call.1} parent=5 // pred_check
        _
      $region54: #{tpu_custom_call.1} parent=5 // pred_check_branch
        %342 = sbr.rel (%p339) target = $region56
      $region55: #{tpu_custom_call.1} parent=5 // pred_region
        %s343 = ssub.s32 %s21, 1
        %s344 = sand.u32 %s76, 1
        %s345 = scalar_lea.sflag [#allocation3], %s344
        %s346 = sand.u32 %s76, 1
        %s347 = smul.addr %s346, 128
        %s348 = scalar_lea.vmem [#allocation2], %s347
        // Predicated region
        $region57: #{tpu_custom_call.1} parent=55 // pred_check
          %p349 = pneg %p89
        $region58: #{tpu_custom_call.1} parent=55 // pred_check_branch
          %351 = sbr.rel (%p349) target = $region60
        $region59: #{tpu_custom_call.1} parent=55 // pred_region
          %352 = dma.done %s345, 2048
        $region60: #{tpu_custom_call.1} parent=55 // pred_fallthru
          _
        %p353 = scmp.lt.s32.totalorder %s30, 1
        %s354 = scalar_select %p353, %s30, 1
        %p355 = scmp.lt.s32.totalorder %s31, 0
        %s356 = scalar_select %p355, %s31, 0
        %s357 = smul.addr %s354, 16
        %s358 = sadd.s32 %s356, %s357
        %s359 = smul.addr %s358, 8
        %s360 = scalar_lea.vmem %s0, %s359
        %p361 = pneg %p61
        %p362 = pneg %p58
        %s363 = sand.u32 %s76, 1
        %s364 = scalar_lea.sflag [#allocation3], %s363
        %s365 = sand.u32 %s76, 1
        %s366 = smul.addr %s365, 128
        %s367 = scalar_lea.vmem [#allocation2], %s366
        %p368 = pneg %p89
        %p369 = pneg %p86
        %p370 = pneg %p110
        %p371 = pneg %p107
        %p372 = pneg %p131
        %p373 = pneg %p128
        %p374 = pneg %p152
        %p375 = pneg %p149
        %p376 = pneg %p173
        %p377 = pneg %p170
        %p378 = pneg %p194
        %p379 = pneg %p191
        %p380 = pneg %p215
        %p381 = pneg %p212
        %p382 = pneg %p236
        %p383 = pneg %p233
        %p384 = pneg %p264
        %p385 = pneg %p261
        %s386 = sand.u32 %s251, 1
        %s387 = scalar_lea.sflag [#allocation4], %s386
        %s388 = sand.u32 %s251, 1
        %s389 = smul.addr %s388, 128
        %s390 = scalar_lea.vmem [#allocation5], %s389
        %p391 = scmp.lt.s32.totalorder %s30, 1
        %s392 = scalar_select %p391, %s30, 1
        %p393 = scmp.lt.s32.totalorder %s31, 0
        %s394 = scalar_select %p393, %s31, 0
        %s395 = smul.addr %s392, 16
        %s396 = sadd.s32 %s394, %s395
        %s397 = smul.addr %s396, 8
        %s398 = scalar_lea.vmem %s0, %s397
        %v400 = vld [vmem:[%s398] sm:$0xff]
        %v401 = vld [vmem:[%s398 + $0x8] sm:$0xff]
        %v402 = vld [vmem:[%s398 + $0x10] sm:$0xff]
        %v403 = vld [vmem:[%s398 + $0x18] sm:$0xff]
        %v404 = vld [vmem:[%s398 + $0x20] sm:$0xff]
        %v405 = vld [vmem:[%s398 + $0x28] sm:$0xff]
        %v406 = vld [vmem:[%s398 + $0x30] sm:$0xff]
        %v407 = vld [vmem:[%s398 + $0x38] sm:$0xff]
        %v408 = vld [vmem:[%s398 + $0x40] sm:$0xff]
        %v409 = vld [vmem:[%s398 + $0x48] sm:$0xff]
        %v410 = vld [vmem:[%s398 + $0x50] sm:$0xff]
        %v411 = vld [vmem:[%s398 + $0x58] sm:$0xff]
        %v412 = vld [vmem:[%s398 + $0x60] sm:$0xff]
        %v413 = vld [vmem:[%s398 + $0x68] sm:$0xff]
        %v414 = vld [vmem:[%s398 + $0x70] sm:$0xff]
        %v415 = vld [vmem:[%s398 + $0x78] sm:$0xff]
        %v416 = vld [vmem:[%s348] sm:$0xff]
        %v417 = vld [vmem:[%s348 + $0x8] sm:$0xff]
        %v418 = vld [vmem:[%s348 + $0x10] sm:$0xff]
        %v419 = vld [vmem:[%s348 + $0x18] sm:$0xff]
        %v420 = vld [vmem:[%s348 + $0x20] sm:$0xff]
        %v421 = vld [vmem:[%s348 + $0x28] sm:$0xff]
        %v422 = vld [vmem:[%s348 + $0x30] sm:$0xff]
        %v423 = vld [vmem:[%s348 + $0x38] sm:$0xff]
        %v424 = vld [vmem:[%s348 + $0x40] sm:$0xff]
        %v425 = vld [vmem:[%s348 + $0x48] sm:$0xff]
        %v426 = vld [vmem:[%s348 + $0x50] sm:$0xff]
        %v427 = vld [vmem:[%s348 + $0x58] sm:$0xff]
        %v428 = vld [vmem:[%s348 + $0x60] sm:$0xff]
        %v429 = vld [vmem:[%s348 + $0x68] sm:$0xff]
        %v430 = vld [vmem:[%s348 + $0x70] sm:$0xff]
        %v431 = vld [vmem:[%s348 + $0x78] sm:$0xff]
        %v432 = vpack.c.bf16 %v401, %v400
        %v433 = vpack.c.bf16 %v403, %v402
        %v434 = vpack.c.bf16 %v405, %v404
        %v435 = vpack.c.bf16 %v407, %v406
        %v436 = vpack.c.bf16 %v409, %v408
        %v437 = vpack.c.bf16 %v411, %v410
        %v438 = vpack.c.bf16 %v413, %v412
        %v439 = vpack.c.bf16 %v415, %v414
        %v440 = vpack.c.bf16 %v417, %v416
        %v441 = vpack.c.bf16 %v419, %v418
        %v442 = vpack.c.bf16 %v421, %v420
        %v443 = vpack.c.bf16 %v423, %v422
        %v444 = vpack.c.bf16 %v425, %v424
        %v445 = vpack.c.bf16 %v427, %v426
        %v446 = vpack.c.bf16 %v429, %v428
        %v447 = vpack.c.bf16 %v431, %v430
        %v448 = vld [vmem:[%s2] sm:$0xf]
        %v449 = vld [vmem:[%s2 + $0x4] sm:$0xf]
        %v450 = vld [vmem:[%s2 + $0x8] sm:$0xf]
        %v451 = vld [vmem:[%s2 + $0xc] sm:$0xf]
        %v452 = vld [vmem:[%s3] sm:$0xff]
        %v453 = vld [vmem:[%s3 + $0x8] sm:$0xff]
        %v454 = vld [vmem:[%s3 + $0x10] sm:$0xff]
        %v455 = vld [vmem:[%s3 + $0x18] sm:$0xff]
        %457 = vset.pattern.permute.xlu0 0
        %458 = vperm.xlu0 %457, %v452
        %v459 = vpop.permute.xlu0 %458
        %462 = vset.pattern.permute.xlu0 0
        %463 = vperm.xlu0 %462, %v453
        %v464 = vpop.permute.xlu0 %463
        %467 = vset.pattern.permute.xlu0 0
        %468 = vperm.xlu0 %467, %v454
        %v469 = vpop.permute.xlu0 %468
        %472 = vset.pattern.permute.xlu0 0
        %473 = vperm.xlu0 %472, %v455
        %v474 = vpop.permute.xlu0 %473
        %v480 = vunpack.c.l.b16 %v448
        %v481 = vunpack.c.l.b16 %v449
        %v482 = vunpack.c.l.b16 %v450
        %v483 = vunpack.c.l.b16 %v451
        %v484 = vpack.c.b16 %v481, %v480
        %v485 = vpack.c.b16 %v483, %v482
        %488 = vmatprep.subr.bf16.mxu0 0
        %489 = vmatpush1.bf16.msra.mxu0 %v432
        %490 = vmatprep.subr.bf16.mxu0 0
        %491 = vmatpush1.bf16.msra.mxu0 %v433
        %492 = vmatprep.subr.bf16.mxu0 0
        %493 = vmatpush1.bf16.msra.mxu0 %v434
        %494 = vmatprep.subr.bf16.mxu0 0
        %495 = vmatpush1.bf16.msra.mxu0 %v435
        %496 = vmatprep.subr.bf16.mxu0 0
        %497 = vmatpush1.bf16.msra.mxu0 %v436
        %498 = vmatprep.subr.bf16.mxu0 0
        %499 = vmatpush1.bf16.msra.mxu0 %v437
        %500 = vmatprep.subr.bf16.mxu0 0
        %501 = vmatpush1.bf16.msra.mxu0 %v438
        %502 = vmatprep.subr.bf16.mxu0 0
        %503 = vmatpush1.bf16.msra.mxu0 %v439
        %504 = vmatprep.subr.bf16.mxu0 0
        %505 = vmatpush1.bf16.msra.mxu0 0
        %506 = vmatprep.subr.bf16.mxu0 0
        %507 = vmatpush1.bf16.msra.mxu0 0
        %508 = vmatprep.subr.bf16.mxu0 0
        %509 = vmatpush1.bf16.msra.mxu0 0
        %510 = vmatprep.subr.bf16.mxu0 0
        %511 = vmatpush1.bf16.msra.mxu0 0
        %512 = vmatprep.subr.bf16.mxu0 0
        %513 = vmatpush1.bf16.msra.mxu0 0
        %514 = vmatprep.subr.bf16.mxu0 0
        %515 = vmatpush1.bf16.msra.mxu0 0
        %516 = vmatprep.subr.bf16.mxu0 0
        %517 = vmatpush1.bf16.msra.mxu0 0
        %518 = vmatprep.subr.bf16.mxu0 0
        %519 = vmatpush1.bf16.msra.mxu0 0
        %520 = vmatprep.mubr.bf16.mxu0 0
        %521 = vmatmul.mubr.bf16.gmra.mrb[0].mxu0 %v484
        %v522 = vpop.f32.mrb[0].mxu0
        %v523 = vadd.f32 %v459, %v522
        %v524 = vpop.f32.mrb[0].mxu0
        %v525 = vpop.f32.mrb[0].mxu0
        %v526 = vadd.f32 %v464, %v525
        %v527 = vpop.f32.mrb[0].mxu0
        %528 = vmatprep.mubr.bf16.mxu0 0
        %529 = vmatmul.mubr.bf16.gmra.mrb[0].mxu0 %v485
        %v530 = vpop.f32.mrb[0].mxu0
        %v531 = vadd.f32 %v469, %v530
        %v532 = vpop.f32.mrb[0].mxu0
        %v533 = vpop.f32.mrb[0].mxu0
        %v534 = vadd.f32 %v474, %v533
        %v535 = vpop.f32.mrb[0].mxu0
        %536 = vdwg.mxu0
        %vm537 = vcmp.gt.f32.partialorder %v523, 0.0
        %vm538 = vcmp.gt.f32.partialorder %v526, 0.0
        %vm539 = vcmp.gt.f32.partialorder %v531, 0.0
        %vm540 = vcmp.gt.f32.partialorder %v534, 0.0
        %v541 = vmul.f32 %v523, 0.01
        %v542 = vmul.f32 %v526, 0.01
        %v543 = vmul.f32 %v531, 0.01
        %v544 = vmul.f32 %v534, 0.01
        %v545 = vsel %vm537, %v523, %v541
        %v546 = vsel %vm538, %v526, %v542
        %v547 = vsel %vm539, %v531, %v543
        %v548 = vsel %vm540, %v534, %v544
        %v549 = vld [vmem:[%s4] sm:$0xf]
        %v550 = vld [vmem:[%s4 + $0x4] sm:$0xf]
        %v551 = vld [vmem:[%s4 + $0x8] sm:$0xf]
        %v552 = vld [vmem:[%s4 + $0xc] sm:$0xf]
        %v553 = vld [vmem:[%s5] sm:$0xff]
        %v554 = vld [vmem:[%s5 + $0x8] sm:$0xff]
        %v555 = vld [vmem:[%s5 + $0x10] sm:$0xff]
        %v556 = vld [vmem:[%s5 + $0x18] sm:$0xff]
        %558 = vset.pattern.permute.xlu0 0
        %559 = vperm.xlu0 %558, %v553
        %v560 = vpop.permute.xlu0 %559
        %563 = vset.pattern.permute.xlu0 0
        %564 = vperm.xlu0 %563, %v554
        %v565 = vpop.permute.xlu0 %564
        %568 = vset.pattern.permute.xlu0 0
        %569 = vperm.xlu0 %568, %v555
        %v570 = vpop.permute.xlu0 %569
        %573 = vset.pattern.permute.xlu0 0
        %574 = vperm.xlu0 %573, %v556
        %v575 = vpop.permute.xlu0 %574
        %v581 = vunpack.c.l.b16 %v549
        %v582 = vunpack.c.l.b16 %v550
        %v583 = vunpack.c.l.b16 %v551
        %v584 = vunpack.c.l.b16 %v552
        %v585 = vpack.c.b16 %v582, %v581
        %v586 = vpack.c.b16 %v584, %v583
        %589 = vmatprep.subr.bf16.mxu0 0
        %590 = vmatpush1.bf16.msra.mxu0 %v440
        %591 = vmatprep.subr.bf16.mxu0 0
        %592 = vmatpush1.bf16.msra.mxu0 %v441
        %593 = vmatprep.subr.bf16.mxu0 0
        %594 = vmatpush1.bf16.msra.mxu0 %v442
        %595 = vmatprep.subr.bf16.mxu0 0
        %596 = vmatpush1.bf16.msra.mxu0 %v443
        %597 = vmatprep.subr.bf16.mxu0 0
        %598 = vmatpush1.bf16.msra.mxu0 %v444
        %599 = vmatprep.subr.bf16.mxu0 0
        %600 = vmatpush1.bf16.msra.mxu0 %v445
        %601 = vmatprep.subr.bf16.mxu0 0
        %602 = vmatpush1.bf16.msra.mxu0 %v446
        %603 = vmatprep.subr.bf16.mxu0 0
        %604 = vmatpush1.bf16.msra.mxu0 %v447
        %605 = vmatprep.subr.bf16.mxu0 0
        %606 = vmatpush1.bf16.msra.mxu0 0
        %607 = vmatprep.subr.bf16.mxu0 0
        %608 = vmatpush1.bf16.msra.mxu0 0
        %609 = vmatprep.subr.bf16.mxu0 0
        %610 = vmatpush1.bf16.msra.mxu0 0
        %611 = vmatprep.subr.bf16.mxu0 0
        %612 = vmatpush1.bf16.msra.mxu0 0
        %613 = vmatprep.subr.bf16.mxu0 0
        %614 = vmatpush1.bf16.msra.mxu0 0
        %615 = vmatprep.subr.bf16.mxu0 0
        %616 = vmatpush1.bf16.msra.mxu0 0
        %617 = vmatprep.subr.bf16.mxu0 0
        %618 = vmatpush1.bf16.msra.mxu0 0
        %619 = vmatprep.subr.bf16.mxu0 0
        %620 = vmatpush1.bf16.msra.mxu0 0
        %621 = vmatprep.mubr.bf16.mxu0 0
        %622 = vmatmul.mubr.bf16.gmra.mrb[0].mxu0 %v585
        %v623 = vpop.f32.mrb[0].mxu0
        %v624 = vadd.f32 %v560, %v623
        %v625 = vpop.f32.mrb[0].mxu0
        %v626 = vpop.f32.mrb[0].mxu0
        %v627 = vadd.f32 %v565, %v626
        %v628 = vpop.f32.mrb[0].mxu0
        %629 = vmatprep.mubr.bf16.mxu0 0
        %630 = vmatmul.mubr.bf16.gmra.mrb[0].mxu0 %v586
        %v631 = vpop.f32.mrb[0].mxu0
        %v632 = vadd.f32 %v570, %v631
        %v633 = vpop.f32.mrb[0].mxu0
        %v634 = vpop.f32.mrb[0].mxu0
        %v635 = vadd.f32 %v575, %v634
        %v636 = vpop.f32.mrb[0].mxu0
        %637 = vdwg.mxu0
        %vm638 = vcmp.gt.f32.partialorder %v624, 0.0
        %vm639 = vcmp.gt.f32.partialorder %v627, 0.0
        %vm640 = vcmp.gt.f32.partialorder %v632, 0.0
        %vm641 = vcmp.gt.f32.partialorder %v635, 0.0
        %v642 = vmul.f32 %v624, 0.01
        %v643 = vmul.f32 %v627, 0.01
        %v644 = vmul.f32 %v632, 0.01
        %v645 = vmul.f32 %v635, 0.01
        %v646 = vsel %vm638, %v624, %v642
        %v647 = vsel %vm639, %v627, %v643
        %v648 = vsel %vm640, %v632, %v644
        %v649 = vsel %vm641, %v635, %v645
        %v650 = vld [vmem:[%s6] sm:$0xf]
        %v651 = vld [vmem:[%s6 + $0x4] sm:$0xf]
        %v652 = vld [vmem:[%s6 + $0x8] sm:$0xf]
        %v653 = vld [vmem:[%s6 + $0xc] sm:$0xf]
        %v654 = vld [vmem:[%s6 + $0x10] sm:$0xf]
        %v655 = vld [vmem:[%s6 + $0x14] sm:$0xf]
        %v656 = vld [vmem:[%s6 + $0x18] sm:$0xf]
        %v657 = vld [vmem:[%s6 + $0x1c] sm:$0xf]
        %v658 = vld [vmem:[%s6 + $0x20] sm:$0xf]
        %v659 = vld [vmem:[%s6 + $0x24] sm:$0xf]
        %v660 = vld [vmem:[%s6 + $0x28] sm:$0xf]
        %v661 = vld [vmem:[%s6 + $0x2c] sm:$0xf]
        %v662 = vld [vmem:[%s6 + $0x30] sm:$0xf]
        %v663 = vld [vmem:[%s6 + $0x34] sm:$0xf]
        %v664 = vld [vmem:[%s6 + $0x38] sm:$0xf]
        %v665 = vld [vmem:[%s6 + $0x3c] sm:$0xf]
        %v666 = vpack.c.bf16 %v546, %v545
        %v667 = vpack.c.bf16 %v548, %v547
        %v668 = vld [vmem:[%s7] sm:$0xf]
        %v669 = vld [vmem:[%s7 + $0x4] sm:$0xf]
        %v670 = vld [vmem:[%s7 + $0x8] sm:$0xf]
        %v671 = vld [vmem:[%s7 + $0xc] sm:$0xf]
        %v672 = vld [vmem:[%s7 + $0x10] sm:$0xf]
        %v673 = vld [vmem:[%s7 + $0x14] sm:$0xf]
        %v674 = vld [vmem:[%s7 + $0x18] sm:$0xf]
        %v675 = vld [vmem:[%s7 + $0x1c] sm:$0xf]
        %v676 = vld [vmem:[%s7 + $0x20] sm:$0xf]
        %v677 = vld [vmem:[%s7 + $0x24] sm:$0xf]
        %v678 = vld [vmem:[%s7 + $0x28] sm:$0xf]
        %v679 = vld [vmem:[%s7 + $0x2c] sm:$0xf]
        %v680 = vld [vmem:[%s7 + $0x30] sm:$0xf]
        %v681 = vld [vmem:[%s7 + $0x34] sm:$0xf]
        %v682 = vld [vmem:[%s7 + $0x38] sm:$0xf]
        %v683 = vld [vmem:[%s7 + $0x3c] sm:$0xf]
        %v684 = vpack.c.bf16 %v647, %v646
        %v685 = vpack.c.bf16 %v649, %v648
        %v702 = vunpack.c.l.b16 %v668
        %v703 = vunpack.c.l.b16 %v669
        %v704 = vunpack.c.l.b16 %v670
        %v705 = vunpack.c.l.b16 %v671
        %v706 = vunpack.c.l.b16 %v672
        %v707 = vunpack.c.l.b16 %v673
        %v708 = vunpack.c.l.b16 %v674
        %v709 = vunpack.c.l.b16 %v675
        %v710 = vunpack.c.l.b16 %v676
        %v711 = vunpack.c.l.b16 %v677
        %v712 = vunpack.c.l.b16 %v678
        %v713 = vunpack.c.l.b16 %v679
        %v714 = vunpack.c.l.b16 %v680
        %v715 = vunpack.c.l.b16 %v681
        %v716 = vunpack.c.l.b16 %v682
        %v717 = vunpack.c.l.b16 %v683
        %v718 = vpack.c.b16 %v703, %v702
        %v719 = vpack.c.b16 %v705, %v704
        %v720 = vpack.c.b16 %v707, %v706
        %v721 = vpack.c.b16 %v709, %v708
        %v722 = vpack.c.b16 %v711, %v710
        %v723 = vpack.c.b16 %v713, %v712
        %v724 = vpack.c.b16 %v715, %v714
        %v725 = vpack.c.b16 %v717, %v716
        %vm726 = vcmask 261120
        %v728 = vsel %vm726, %v718, 0
        %v731 = vsel %vm726, %v719, 0
        %v734 = vsel %vm726, %v720, 0
        %v737 = vsel %vm726, %v721, 0
        %v740 = vsel %vm726, %v722, 0
        %v743 = vsel %vm726, %v723, 0
        %v746 = vsel %vm726, %v724, 0
        %v749 = vsel %vm726, %v725, 0
        %751 = vmatprep.subr.bf16.mxu0 0
        %752 = vmatpush1.bf16.msra.mxu0 %v684
        %753 = vmatprep.subr.bf16.mxu0 0
        %754 = vmatpush1.bf16.msra.mxu0 %v685
        %755 = vmatprep.subr.bf16.mxu0 0
        %756 = vmatpush1.bf16.msra.mxu0 0
        %757 = vmatprep.subr.bf16.mxu0 0
        %758 = vmatpush1.bf16.msra.mxu0 0
        %759 = vmatprep.subr.bf16.mxu0 0
        %760 = vmatpush1.bf16.msra.mxu0 0
        %761 = vmatprep.subr.bf16.mxu0 0
        %762 = vmatpush1.bf16.msra.mxu0 0
        %763 = vmatprep.subr.bf16.mxu0 0
        %764 = vmatpush1.bf16.msra.mxu0 0
        %765 = vmatprep.subr.bf16.mxu0 0
        %766 = vmatpush1.bf16.msra.mxu0 0
        %767 = vmatprep.subr.bf16.mxu0 0
        %768 = vmatpush1.bf16.msra.mxu0 0
        %769 = vmatprep.subr.bf16.mxu0 0
        %770 = vmatpush1.bf16.msra.mxu0 0
        %771 = vmatprep.subr.bf16.mxu0 0
        %772 = vmatpush1.bf16.msra.mxu0 0
        %773 = vmatprep.subr.bf16.mxu0 0
        %774 = vmatpush1.bf16.msra.mxu0 0
        %775 = vmatprep.subr.bf16.mxu0 0
        %776 = vmatpush1.bf16.msra.mxu0 0
        %777 = vmatprep.subr.bf16.mxu0 0
        %778 = vmatpush1.bf16.msra.mxu0 0
        %779 = vmatprep.subr.bf16.mxu0 0
        %780 = vmatpush1.bf16.msra.mxu0 0
        %781 = vmatprep.subr.bf16.mxu0 0
        %782 = vmatpush1.bf16.msra.mxu0 0
        %783 = vmatprep.mubr.bf16.mxu0 0
        %784 = vmatmul.mubr.bf16.gmra.mrb[0].mxu0 %v728
        %v785 = vpop.f32.mrb[0].mxu0
        %v786 = vadd.f32 0.0, %v785
        %v787 = vpop.f32.mrb[0].mxu0
        %v788 = vpop.f32.mrb[0].mxu0
        %v789 = vadd.f32 0.0, %v788
        %v790 = vpop.f32.mrb[0].mxu0
        %791 = vmatprep.mubr.bf16.mxu0 0
        %792 = vmatmul.mubr.bf16.gmra.mrb[0].mxu0 %v731
        %v793 = vpop.f32.mrb[0].mxu0
        %v794 = vadd.f32 0.0, %v793
        %v795 = vpop.f32.mrb[0].mxu0
        %v796 = vpop.f32.mrb[0].mxu0
        %v797 = vadd.f32 0.0, %v796
        %v798 = vpop.f32.mrb[0].mxu0
        %799 = vmatprep.mubr.bf16.mxu0 0
        %800 = vmatmul.mubr.bf16.gmra.mrb[0].mxu0 %v734
        %v801 = vpop.f32.mrb[0].mxu0
        %v802 = vadd.f32 0.0, %v801
        %v803 = vpop.f32.mrb[0].mxu0
        %v804 = vpop.f32.mrb[0].mxu0
        %v805 = vadd.f32 0.0, %v804
        %v806 = vpop.f32.mrb[0].mxu0
        %807 = vmatprep.mubr.bf16.mxu0 0
        %808 = vmatmul.mubr.bf16.gmra.mrb[0].mxu0 %v737
        %v809 = vpop.f32.mrb[0].mxu0
        %v810 = vadd.f32 0.0, %v809
        %v811 = vpop.f32.mrb[0].mxu0
        %v812 = vpop.f32.mrb[0].mxu0
        %v813 = vadd.f32 0.0, %v812
        %v814 = vpop.f32.mrb[0].mxu0
        %815 = vmatprep.mubr.bf16.mxu0 0
        %816 = vmatmul.mubr.bf16.gmra.mrb[0].mxu0 %v740
        %v817 = vpop.f32.mrb[0].mxu0
        %v818 = vadd.f32 0.0, %v817
        %v819 = vpop.f32.mrb[0].mxu0
        %v820 = vpop.f32.mrb[0].mxu0
        %v821 = vadd.f32 0.0, %v820
        %v822 = vpop.f32.mrb[0].mxu0
        %823 = vmatprep.mubr.bf16.mxu0 0
        %824 = vmatmul.mubr.bf16.gmra.mrb[0].mxu0 %v743
        %v825 = vpop.f32.mrb[0].mxu0
        %v826 = vadd.f32 0.0, %v825
        %v827 = vpop.f32.mrb[0].mxu0
        %v828 = vpop.f32.mrb[0].mxu0
        %v829 = vadd.f32 0.0, %v828
        %v830 = vpop.f32.mrb[0].mxu0
        %831 = vmatprep.mubr.bf16.mxu0 0
        %832 = vmatmul.mubr.bf16.gmra.mrb[0].mxu0 %v746
        %v833 = vpop.f32.mrb[0].mxu0
        %v834 = vadd.f32 0.0, %v833
        %v835 = vpop.f32.mrb[0].mxu0
        %v836 = vpop.f32.mrb[0].mxu0
        %v837 = vadd.f32 0.0, %v836
        %v838 = vpop.f32.mrb[0].mxu0
        %839 = vmatprep.mubr.bf16.mxu0 0
        %840 = vmatmul.mubr.bf16.gmra.mrb[0].mxu0 %v749
        %v841 = vpop.f32.mrb[0].mxu0
        %v842 = vadd.f32 0.0, %v841
        %v843 = vpop.f32.mrb[0].mxu0
        %v844 = vpop.f32.mrb[0].mxu0
        %v845 = vadd.f32 0.0, %v844
        %v846 = vpop.f32.mrb[0].mxu0
        %847 = vdwg.mxu0
        %v864 = vunpack.c.l.b16 %v650
        %v865 = vunpack.c.l.b16 %v651
        %v866 = vunpack.c.l.b16 %v652
        %v867 = vunpack.c.l.b16 %v653
        %v868 = vunpack.c.l.b16 %v654
        %v869 = vunpack.c.l.b16 %v655
        %v870 = vunpack.c.l.b16 %v656
        %v871 = vunpack.c.l.b16 %v657
        %v872 = vunpack.c.l.b16 %v658
        %v873 = vunpack.c.l.b16 %v659
        %v874 = vunpack.c.l.b16 %v660
        %v875 = vunpack.c.l.b16 %v661
        %v876 = vunpack.c.l.b16 %v662
        %v877 = vunpack.c.l.b16 %v663
        %v878 = vunpack.c.l.b16 %v664
        %v879 = vunpack.c.l.b16 %v665
        %v880 = vpack.c.b16 %v865, %v864
        %v881 = vpack.c.b16 %v867, %v866
        %v882 = vpack.c.b16 %v869, %v868
        %v883 = vpack.c.b16 %v871, %v870
        %v884 = vpack.c.b16 %v873, %v872
        %v885 = vpack.c.b16 %v875, %v874
        %v886 = vpack.c.b16 %v877, %v876
        %v887 = vpack.c.b16 %v879, %v878
        %v889 = vsel %vm726, %v880, 0
        %v892 = vsel %vm726, %v881, 0
        %v895 = vsel %vm726, %v882, 0
        %v898 = vsel %vm726, %v883, 0
        %v901 = vsel %vm726, %v884, 0
        %v904 = vsel %vm726, %v885, 0
        %v907 = vsel %vm726, %v886, 0
        %v910 = vsel %vm726, %v887, 0
        %912 = vmatprep.subr.bf16.mxu0 0
        %913 = vmatpush1.bf16.msra.mxu0 %v666
        %914 = vmatprep.subr.bf16.mxu0 0
        %915 = vmatpush1.bf16.msra.mxu0 %v667
        %916 = vmatprep.subr.bf16.mxu0 0
        %917 = vmatpush1.bf16.msra.mxu0 0
        %918 = vmatprep.subr.bf16.mxu0 0
        %919 = vmatpush1.bf16.msra.mxu0 0
        %920 = vmatprep.subr.bf16.mxu0 0
        %921 = vmatpush1.bf16.msra.mxu0 0
        %922 = vmatprep.subr.bf16.mxu0 0
        %923 = vmatpush1.bf16.msra.mxu0 0
        %924 = vmatprep.subr.bf16.mxu0 0
        %925 = vmatpush1.bf16.msra.mxu0 0
        %926 = vmatprep.subr.bf16.mxu0 0
        %927 = vmatpush1.bf16.msra.mxu0 0
        %928 = vmatprep.subr.bf16.mxu0 0
        %929 = vmatpush1.bf16.msra.mxu0 0
        %930 = vmatprep.subr.bf16.mxu0 0
        %931 = vmatpush1.bf16.msra.mxu0 0
        %932 = vmatprep.subr.bf16.mxu0 0
        %933 = vmatpush1.bf16.msra.mxu0 0
        %934 = vmatprep.subr.bf16.mxu0 0
        %935 = vmatpush1.bf16.msra.mxu0 0
        %936 = vmatprep.subr.bf16.mxu0 0
        %937 = vmatpush1.bf16.msra.mxu0 0
        %938 = vmatprep.subr.bf16.mxu0 0
        %939 = vmatpush1.bf16.msra.mxu0 0
        %940 = vmatprep.subr.bf16.mxu0 0
        %941 = vmatpush1.bf16.msra.mxu0 0
        %942 = vmatprep.subr.bf16.mxu0 0
        %943 = vmatpush1.bf16.msra.mxu0 0
        %944 = vmatprep.mubr.bf16.mxu0 0
        %945 = vmatmul.mubr.bf16.gmra.mrb[0].mxu0 %v889
        %v946 = vpop.f32.mrb[0].mxu0
        %v947 = vadd.f32 %v786, %v946
        %v948 = vpop.f32.mrb[0].mxu0
        %v949 = vpop.f32.mrb[0].mxu0
        %v950 = vadd.f32 %v789, %v949
        %v951 = vpop.f32.mrb[0].mxu0
        %952 = vmatprep.mubr.bf16.mxu0 0
        %953 = vmatmul.mubr.bf16.gmra.mrb[0].mxu0 %v892
        %v954 = vpop.f32.mrb[0].mxu0
        %v955 = vadd.f32 %v794, %v954
        %v956 = vpop.f32.mrb[0].mxu0
        %v957 = vpop.f32.mrb[0].mxu0
        %v958 = vadd.f32 %v797, %v957
        %v959 = vpop.f32.mrb[0].mxu0
        %960 = vmatprep.mubr.bf16.mxu0 0
        %961 = vmatmul.mubr.bf16.gmra.mrb[0].mxu0 %v895
        %v962 = vpop.f32.mrb[0].mxu0
        %v963 = vadd.f32 %v802, %v962
        %v964 = vpop.f32.mrb[0].mxu0
        %v965 = vpop.f32.mrb[0].mxu0
        %v966 = vadd.f32 %v805, %v965
        %v967 = vpop.f32.mrb[0].mxu0
        %968 = vmatprep.mubr.bf16.mxu0 0
        %969 = vmatmul.mubr.bf16.gmra.mrb[0].mxu0 %v898
        %v970 = vpop.f32.mrb[0].mxu0
        %v971 = vadd.f32 %v810, %v970
        %v972 = vpop.f32.mrb[0].mxu0
        %v973 = vpop.f32.mrb[0].mxu0
        %v974 = vadd.f32 %v813, %v973
        %v975 = vpop.f32.mrb[0].mxu0
        %976 = vmatprep.mubr.bf16.mxu0 0
        %977 = vmatmul.mubr.bf16.gmra.mrb[0].mxu0 %v901
        %v978 = vpop.f32.mrb[0].mxu0
        %v979 = vadd.f32 %v818, %v978
        %v980 = vpop.f32.mrb[0].mxu0
        %v981 = vpop.f32.mrb[0].mxu0
        %v982 = vadd.f32 %v821, %v981
        %v983 = vpop.f32.mrb[0].mxu0
        %984 = vmatprep.mubr.bf16.mxu0 0
        %985 = vmatmul.mubr.bf16.gmra.mrb[0].mxu0 %v904
        %v986 = vpop.f32.mrb[0].mxu0
        %v987 = vadd.f32 %v826, %v986
        %v988 = vpop.f32.mrb[0].mxu0
        %v989 = vpop.f32.mrb[0].mxu0
        %v990 = vadd.f32 %v829, %v989
        %v991 = vpop.f32.mrb[0].mxu0
        %992 = vmatprep.mubr.bf16.mxu0 0
        %993 = vmatmul.mubr.bf16.gmra.mrb[0].mxu0 %v907
        %v994 = vpop.f32.mrb[0].mxu0
        %v995 = vadd.f32 %v834, %v994
        %v996 = vpop.f32.mrb[0].mxu0
        %v997 = vpop.f32.mrb[0].mxu0
        %v998 = vadd.f32 %v837, %v997
        %v999 = vpop.f32.mrb[0].mxu0
        %1000 = vmatprep.mubr.bf16.mxu0 0
        %1001 = vmatmul.mubr.bf16.gmra.mrb[0].mxu0 %v910
        %v1002 = vpop.f32.mrb[0].mxu0
        %v1003 = vadd.f32 %v842, %v1002
        %v1004 = vpop.f32.mrb[0].mxu0
        %v1005 = vpop.f32.mrb[0].mxu0
        %v1006 = vadd.f32 %v845, %v1005
        %v1007 = vpop.f32.mrb[0].mxu0
        %1008 = vdwg.mxu0
        %v1009 = vld [vmem:[%s8] sm:$0xff]
        %v1010 = vld [vmem:[%s8 + $0x8] sm:$0xff]
        %v1011 = vld [vmem:[%s8 + $0x10] sm:$0xff]
        %v1012 = vld [vmem:[%s8 + $0x18] sm:$0xff]
        %v1013 = vld [vmem:[%s8 + $0x20] sm:$0xff]
        %v1014 = vld [vmem:[%s8 + $0x28] sm:$0xff]
        %v1015 = vld [vmem:[%s8 + $0x30] sm:$0xff]
        %v1016 = vld [vmem:[%s8 + $0x38] sm:$0xff]
        %v1017 = vld [vmem:[%s8 + $0x40] sm:$0xff]
        %v1018 = vld [vmem:[%s8 + $0x48] sm:$0xff]
        %v1019 = vld [vmem:[%s8 + $0x50] sm:$0xff]
        %v1020 = vld [vmem:[%s8 + $0x58] sm:$0xff]
        %v1021 = vld [vmem:[%s8 + $0x60] sm:$0xff]
        %v1022 = vld [vmem:[%s8 + $0x68] sm:$0xff]
        %v1023 = vld [vmem:[%s8 + $0x70] sm:$0xff]
        %v1024 = vld [vmem:[%s8 + $0x78] sm:$0xff]
        %1026 = vset.pattern.permute.xlu0 0
        %1027 = vperm.xlu0 %1026, %v1009
        %v1028 = vpop.permute.xlu0 %1027
        %1031 = vset.pattern.permute.xlu0 0
        %1032 = vperm.xlu0 %1031, %v1010
        %v1033 = vpop.permute.xlu0 %1032
        %1036 = vset.pattern.permute.xlu0 0
        %1037 = vperm.xlu0 %1036, %v1011
        %v1038 = vpop.permute.xlu0 %1037
        %1041 = vset.pattern.permute.xlu0 0
        %1042 = vperm.xlu0 %1041, %v1012
        %v1043 = vpop.permute.xlu0 %1042
        %1046 = vset.pattern.permute.xlu0 0
        %1047 = vperm.xlu0 %1046, %v1013
        %v1048 = vpop.permute.xlu0 %1047
        %1051 = vset.pattern.permute.xlu0 0
        %1052 = vperm.xlu0 %1051, %v1014
        %v1053 = vpop.permute.xlu0 %1052
        %1056 = vset.pattern.permute.xlu0 0
        %1057 = vperm.xlu0 %1056, %v1015
        %v1058 = vpop.permute.xlu0 %1057
        %1061 = vset.pattern.permute.xlu0 0
        %1062 = vperm.xlu0 %1061, %v1016
        %v1063 = vpop.permute.xlu0 %1062
        %1066 = vset.pattern.permute.xlu0 0
        %1067 = vperm.xlu0 %1066, %v1017
        %v1068 = vpop.permute.xlu0 %1067
        %1071 = vset.pattern.permute.xlu0 0
        %1072 = vperm.xlu0 %1071, %v1018
        %v1073 = vpop.permute.xlu0 %1072
        %1076 = vset.pattern.permute.xlu0 0
        %1077 = vperm.xlu0 %1076, %v1019
        %v1078 = vpop.permute.xlu0 %1077
        %1081 = vset.pattern.permute.xlu0 0
        %1082 = vperm.xlu0 %1081, %v1020
        %v1083 = vpop.permute.xlu0 %1082
        %1086 = vset.pattern.permute.xlu0 0
        %1087 = vperm.xlu0 %1086, %v1021
        %v1088 = vpop.permute.xlu0 %1087
        %1091 = vset.pattern.permute.xlu0 0
        %1092 = vperm.xlu0 %1091, %v1022
        %v1093 = vpop.permute.xlu0 %1092
        %1096 = vset.pattern.permute.xlu0 0
        %1097 = vperm.xlu0 %1096, %v1023
        %v1098 = vpop.permute.xlu0 %1097
        %1101 = vset.pattern.permute.xlu0 0
        %1102 = vperm.xlu0 %1101, %v1024
        %v1103 = vpop.permute.xlu0 %1102
        %v1105 = vadd.f32 %v947, %v1028
        %v1106 = vadd.f32 %v950, %v1033
        %v1107 = vadd.f32 %v955, %v1038
        %v1108 = vadd.f32 %v958, %v1043
        %v1109 = vadd.f32 %v963, %v1048
        %v1110 = vadd.f32 %v966, %v1053
        %v1111 = vadd.f32 %v971, %v1058
        %v1112 = vadd.f32 %v974, %v1063
        %v1113 = vadd.f32 %v979, %v1068
        %v1114 = vadd.f32 %v982, %v1073
        %v1115 = vadd.f32 %v987, %v1078
        %v1116 = vadd.f32 %v990, %v1083
        %v1117 = vadd.f32 %v995, %v1088
        %v1118 = vadd.f32 %v998, %v1093
        %v1119 = vadd.f32 %v1003, %v1098
        %v1120 = vadd.f32 %v1006, %v1103
        %v1121 = vxor.u32 %v1105, 2147483648
        %v1122 = vxor.u32 %v1106, 2147483648
        %v1123 = vxor.u32 %v1107, 2147483648
        %v1124 = vxor.u32 %v1108, 2147483648
        %v1125 = vxor.u32 %v1109, 2147483648
        %v1126 = vxor.u32 %v1110, 2147483648
        %v1127 = vxor.u32 %v1111, 2147483648
        %v1128 = vxor.u32 %v1112, 2147483648
        %v1129 = vxor.u32 %v1113, 2147483648
        %v1130 = vxor.u32 %v1114, 2147483648
        %v1131 = vxor.u32 %v1115, 2147483648
        %v1132 = vxor.u32 %v1116, 2147483648
        %v1133 = vxor.u32 %v1117, 2147483648
        %v1134 = vxor.u32 %v1118, 2147483648
        %v1135 = vxor.u32 %v1119, 2147483648
        %v1136 = vxor.u32 %v1120, 2147483648
        %v1137 = vmul.f32 %v1121, 1.442695
        %v1138 = vpow.pop %v1137
        %v1139 = vmul.f32 %v1122, 1.442695
        %v1140 = vpow.pop %v1139
        %v1141 = vmul.f32 %v1123, 1.442695
        %v1142 = vpow.pop %v1141
        %v1143 = vmul.f32 %v1124, 1.442695
        %v1144 = vpow.pop %v1143
        %v1145 = vmul.f32 %v1125, 1.442695
        %v1146 = vpow.pop %v1145
        %v1147 = vmul.f32 %v1126, 1.442695
        %v1148 = vpow.pop %v1147
        %v1149 = vmul.f32 %v1127, 1.442695
        %v1150 = vpow.pop %v1149
        %v1151 = vmul.f32 %v1128, 1.442695
        %v1152 = vpow.pop %v1151
        %v1153 = vmul.f32 %v1129, 1.442695
        %v1154 = vpow.pop %v1153
        %v1155 = vmul.f32 %v1130, 1.442695
        %v1156 = vpow.pop %v1155
        %v1157 = vmul.f32 %v1131, 1.442695
        %v1158 = vpow.pop %v1157
        %v1159 = vmul.f32 %v1132, 1.442695
        %v1160 = vpow.pop %v1159
        %v1161 = vmul.f32 %v1133, 1.442695
        %v1162 = vpow.pop %v1161
        %v1163 = vmul.f32 %v1134, 1.442695
        %v1164 = vpow.pop %v1163
        %v1165 = vmul.f32 %v1135, 1.442695
        %v1166 = vpow.pop %v1165
        %v1167 = vmul.f32 %v1136, 1.442695
        %v1168 = vpow.pop %v1167
        %v1169 = vadd.f32 %v1138, 1.0
        %v1170 = vadd.f32 %v1140, 1.0
        %v1171 = vadd.f32 %v1142, 1.0
        %v1172 = vadd.f32 %v1144, 1.0
        %v1173 = vadd.f32 %v1146, 1.0
        %v1174 = vadd.f32 %v1148, 1.0
        %v1175 = vadd.f32 %v1150, 1.0
        %v1176 = vadd.f32 %v1152, 1.0
        %v1177 = vadd.f32 %v1154, 1.0
        %v1178 = vadd.f32 %v1156, 1.0
        %v1179 = vadd.f32 %v1158, 1.0
        %v1180 = vadd.f32 %v1160, 1.0
        %v1181 = vadd.f32 %v1162, 1.0
        %v1182 = vadd.f32 %v1164, 1.0
        %v1183 = vadd.f32 %v1166, 1.0
        %v1184 = vadd.f32 %v1168, 1.0
        %v1185 = vrcp.pop %v1169
        %v1186 = vmul.f32 1.0, %v1185
        %v1187 = vrcp.pop %v1170
        %v1188 = vmul.f32 1.0, %v1187
        %v1189 = vrcp.pop %v1171
        %v1190 = vmul.f32 1.0, %v1189
        %v1191 = vrcp.pop %v1172
        %v1192 = vmul.f32 1.0, %v1191
        %v1193 = vrcp.pop %v1173
        %v1194 = vmul.f32 1.0, %v1193
        %v1195 = vrcp.pop %v1174
        %v1196 = vmul.f32 1.0, %v1195
        %v1197 = vrcp.pop %v1175
        %v1198 = vmul.f32 1.0, %v1197
        %v1199 = vrcp.pop %v1176
        %v1200 = vmul.f32 1.0, %v1199
        %v1201 = vrcp.pop %v1177
        %v1202 = vmul.f32 1.0, %v1201
        %v1203 = vrcp.pop %v1178
        %v1204 = vmul.f32 1.0, %v1203
        %v1205 = vrcp.pop %v1179
        %v1206 = vmul.f32 1.0, %v1205
        %v1207 = vrcp.pop %v1180
        %v1208 = vmul.f32 1.0, %v1207
        %v1209 = vrcp.pop %v1181
        %v1210 = vmul.f32 1.0, %v1209
        %v1211 = vrcp.pop %v1182
        %v1212 = vmul.f32 1.0, %v1211
        %v1213 = vrcp.pop %v1183
        %v1214 = vmul.f32 1.0, %v1213
        %v1215 = vrcp.pop %v1184
        %v1216 = vmul.f32 1.0, %v1215
        %v1217 = vsub.f32 %v400, %v416
        %v1218 = vsub.f32 %v401, %v417
        %v1219 = vsub.f32 %v402, %v418
        %v1220 = vsub.f32 %v403, %v419
        %v1221 = vsub.f32 %v404, %v420
        %v1222 = vsub.f32 %v405, %v421
        %v1223 = vsub.f32 %v406, %v422
        %v1224 = vsub.f32 %v407, %v423
        %v1225 = vsub.f32 %v408, %v424
        %v1226 = vsub.f32 %v409, %v425
        %v1227 = vsub.f32 %v410, %v426
        %v1228 = vsub.f32 %v411, %v427
        %v1229 = vsub.f32 %v412, %v428
        %v1230 = vsub.f32 %v413, %v429
        %v1231 = vsub.f32 %v414, %v430
        %v1232 = vsub.f32 %v415, %v431
        %v1233 = vmul.f32 %v1217, %v1186
        %v1234 = vmul.f32 %v1218, %v1188
        %v1235 = vmul.f32 %v1219, %v1190
        %v1236 = vmul.f32 %v1220, %v1192
        %v1237 = vmul.f32 %v1221, %v1194
        %v1238 = vmul.f32 %v1222, %v1196
        %v1239 = vmul.f32 %v1223, %v1198
        %v1240 = vmul.f32 %v1224, %v1200
        %v1241 = vmul.f32 %v1225, %v1202
        %v1242 = vmul.f32 %v1226, %v1204
        %v1243 = vmul.f32 %v1227, %v1206
        %v1244 = vmul.f32 %v1228, %v1208
        %v1245 = vmul.f32 %v1229, %v1210
        %v1246 = vmul.f32 %v1230, %v1212
        %v1247 = vmul.f32 %v1231, %v1214
        %v1248 = vmul.f32 %v1232, %v1216
        %v1249 = vadd.f32 %v416, %v1233
        %v1250 = vadd.f32 %v417, %v1234
        %v1251 = vadd.f32 %v418, %v1235
        %v1252 = vadd.f32 %v419, %v1236
        %v1253 = vadd.f32 %v420, %v1237
        %v1254 = vadd.f32 %v421, %v1238
        %v1255 = vadd.f32 %v422, %v1239
        %v1256 = vadd.f32 %v423, %v1240
        %v1257 = vadd.f32 %v424, %v1241
        %v1258 = vadd.f32 %v425, %v1242
        %v1259 = vadd.f32 %v426, %v1243
        %v1260 = vadd.f32 %v427, %v1244
        %v1261 = vadd.f32 %v428, %v1245
        %v1262 = vadd.f32 %v429, %v1246
        %v1263 = vadd.f32 %v430, %v1247
        %v1264 = vadd.f32 %v431, %v1248
        %1265 = vst [vmem:[%s390] sm:$0xff] %v1249
        %1266 = vst [vmem:[%s390 + $0x8] sm:$0xff] %v1250
        %1267 = vst [vmem:[%s390 + $0x10] sm:$0xff] %v1251
        %1268 = vst [vmem:[%s390 + $0x18] sm:$0xff] %v1252
        %1269 = vst [vmem:[%s390 + $0x20] sm:$0xff] %v1253
        %1270 = vst [vmem:[%s390 + $0x28] sm:$0xff] %v1254
        %1271 = vst [vmem:[%s390 + $0x30] sm:$0xff] %v1255
        %1272 = vst [vmem:[%s390 + $0x38] sm:$0xff] %v1256
        %1273 = vst [vmem:[%s390 + $0x40] sm:$0xff] %v1257
        %1274 = vst [vmem:[%s390 + $0x48] sm:$0xff] %v1258
        %1275 = vst [vmem:[%s390 + $0x50] sm:$0xff] %v1259
        %1276 = vst [vmem:[%s390 + $0x58] sm:$0xff] %v1260
        %1277 = vst [vmem:[%s390 + $0x60] sm:$0xff] %v1261
        %1278 = vst [vmem:[%s390 + $0x68] sm:$0xff] %v1262
        %1279 = vst [vmem:[%s390 + $0x70] sm:$0xff] %v1263
        %1280 = vst [vmem:[%s390 + $0x78] sm:$0xff] %v1264
        %s1281 = sand.u32 %s251, 1
        %s1282 = scalar_lea.sflag [#allocation4], %s1281
        %s1283 = sand.u32 %s251, 1
        %s1284 = smul.addr %s1283, 128
        %s1285 = scalar_lea.vmem [#allocation5], %s1284
        // Predicated region
        $region61: #{tpu_custom_call.1} parent=55 // pred_check
          %p1286 = pneg %p261
        $region62: #{tpu_custom_call.1} parent=55 // pred_check_branch
          %1288 = sbr.rel (%p1286) target = $region64
        $region63: #{tpu_custom_call.1} parent=55 // pred_region
          %s1290 = ssub.s32 2048, 2048
          %1291 = vsyncadd %s1282, %s1290
          %s1292 = smul.addr %s30, 16
          %s1293 = sadd.s32 %s31, %s1292
          %s1294 = smul.addr %s1293, 128
          %s1295 = scalar_lea.hbm %s9, %s1294
          %s1296 = sshll.u32 %s1285, 4
          %s1297 = int_to_ptr.vmem [resolvable:$true] %s1296
          %1302 = dma.vmem_to_hbm [thread:$0]  %s1297, 2048, %s1295, %s1282, 128, 128, 8
        $region64: #{tpu_custom_call.1} parent=55 // pred_fallthru
          _
      $region56: #{tpu_custom_call.1} parent=5 // pred_fallthru
        _
      %p1303 = scmp.le.s32.totalorder 2, %s21
      // Predicated region
      $region65: #{tpu_custom_call.1} parent=5 // pred_check
        %p1304 = pneg %p1303
      $region66: #{tpu_custom_call.1} parent=5 // pred_check_branch
        %1306 = sbr.rel (%p1304) target = $region68
      $region67: #{tpu_custom_call.1} parent=5 // pred_region
        %s1307 = ssub.s32 %s21, 2
        // Predicated region
        $region69: #{tpu_custom_call.1} parent=67 // pred_check
          %p1308 = pneg %p267
        $region70: #{tpu_custom_call.1} parent=67 // pred_check_branch
          %1310 = sbr.rel (%p1308) target = $region72
        $region71: #{tpu_custom_call.1} parent=67 // pred_region
          %s1311 = sand.u32 %s252, 1
          %s1312 = scalar_lea.sflag [#allocation4], %s1311
          %s1313 = sand.u32 %s252, 1
          %s1314 = smul.addr %s1313, 128
          %s1315 = scalar_lea.vmem [#allocation5], %s1314
          %1316 = dma.done %s1312, 2048
        $region72: #{tpu_custom_call.1} parent=67 // pred_fallthru
          _
      $region68: #{tpu_custom_call.1} parent=5 // pred_fallthru
        _
    $region6: #{tpu_custom_call.1} parent=1 // loop_footer
      %s25 = sadd.s32 1, %s21
    $region7: #{tpu_custom_call.1} parent=1 // loop_footer_branch
      %20 = sbr.rel target = $region3
    $region8: #{tpu_custom_call.1} parent=1 // loop_exit
      _
    %1317 = vsyncpa [#allocation3], 1
    %s1318 = scalar_lea.sflag [#allocation3], 1
    %1319 = vsyncpa %s1318, 1
    %1320 = vsyncpa [#allocation4], 1
    %s1321 = scalar_lea.sflag [#allocation4], 1
    %1322 = vsyncpa %s1321, 1

</llo_original>
